<compile_context>
chip_gen: v7x
topology: tpu7x:2x2x1
jax: 0.10.0
libtpu: 0.0.40
codegen_flags: <defaults>
</compile_context>

<pallas_src>
import functools

import jax
import jax.numpy as jnp
from jax import lax
from jax.experimental import pallas as pl
from jax.experimental.pallas import tpu as pltpu


def _round_up(x, m):
    return (x + m - 1) // m * m


# ----------------------------------------------------------------------------
# Fused sequence kernel.  One grid step = one chunk of t_chunk timesteps.
#   xp     = x_chunk @ Wx_fused + b_fused                 (one MXU call / chunk)
#   per t:  z   = xp[t] + h @ Wh_fused                    (one MXU call / step)
#           h  <- z[:, :H]                                (carry, in vregs)
#           out = softmax(z[:, H:H+O])                    (off the serial path)
#           slab[t] = [ h | softmax | ~0 pad ]            (lane-dense 128-wide)
# ----------------------------------------------------------------------------
def seq_rnn_kernel(x_ref, wx_ref, wh_ref, b_ref, h0_ref, slab_ref, h_carry,
                   *, hidden_size, output_size, t_chunk, batch):
    H, O, B = hidden_size, output_size, batch
    n_pad = slab_ref.shape[-1]

    @pl.when(pl.program_id(0) == 0)
    def _():
        h_carry[...] = h0_ref[...]

    # Loop-invariant column masks: computed once per chunk, not per timestep.
    col = lax.broadcasted_iota(jnp.int32, (B, n_pad), 1)
    is_hidden = col < H
    is_logit = jnp.logical_and(col >= H, col < H + O)

    # Non-recurrent input projection for the whole chunk (off the serial path).
    xp = (jnp.dot(x_ref[...], wx_ref[...], preferred_element_type=jnp.float32)
          + b_ref[...])                                     # [t_chunk*B, n_pad]

    h = h_carry[...]                                        # [B, H], lives in vregs
    for t in range(t_chunk):                                # fully unrolled (small chunk)
        z = xp[t * B:(t + 1) * B, :] + jnp.dot(
            h, wh_ref[...], preferred_element_type=jnp.float32)  # [B, n_pad]

        # Carry comes straight from the matmul result: the softmax epilogue is
        # NOT on the serial t -> t+1 dependency chain.
        h = z[:, :H]

        # Softmax over the logit lanes only; hidden + pad lanes are masked so
        # they contribute exp(-inf) == 0 to the denominator.
        logits = jnp.where(is_logit, z, -1e30)
        m = jnp.max(logits, axis=1, keepdims=True)
        e = jnp.exp(logits - m)
        denom = jnp.sum(e, axis=1, keepdims=True)
        softmax = e / denom   # exact normalize; pl.reciprocal(approx) optional

        # Lane-dense packed store: cols [0:H] = new hidden, [H:H+O] = softmax.
        slab_ref[t] = jnp.where(is_hidden, z, softmax).astype(slab_ref.dtype)

    h_carry[...] = h


# ----------------------------------------------------------------------------
# Parameter fusion: concat i2h / i2o along the output axis, pad to 128 lanes.
# ----------------------------------------------------------------------------
def _fuse_params(params, hidden_size, output_size):
    H, O = hidden_size, output_size
    n_real = H + O
    n_pad = _round_up(n_real, 128)

    wx = jnp.concatenate([params["wx_i2h"], params["wx_i2o"]], axis=1)   # [I, H+O]
    wh = jnp.concatenate([params["wh_i2h"], params["wh_i2o"]], axis=1)   # [H, H+O]
    b = jnp.concatenate([params["b_i2h"], params["b_i2o"]], axis=1)      # [1, H+O]

    pad = n_pad - n_real
    wx_pad = jnp.pad(wx, ((0, 0), (0, pad))).astype(jnp.float32)         # [I, Npad]
    wh_pad = jnp.pad(wh, ((0, 0), (0, pad))).astype(jnp.float32)         # [H, Npad]
    b_pad = jnp.pad(b, ((0, 0), (0, pad))).astype(jnp.float32)           # [1, Npad]
    return wx_pad, wh_pad, b_pad, n_pad


# ----------------------------------------------------------------------------
# Wrappers
# ----------------------------------------------------------------------------
def seq_rnn_sequence(xs, h0, params, *, max_chunk=32):
    """Run the SeqRNN cell over a whole sequence.

    xs: [T, B, I], h0: [B, H] -> (outs [T, B, O], hiddens [T, B, H]).
    """
    T, B, I = xs.shape
    H = h0.shape[1]
    O = params["b_i2o"].shape[1]
    wx_pad, wh_pad, b_pad, n_pad = _fuse_params(params, H, O)

    t_chunk = min(T, max_chunk)
    n_chunks = pl.cdiv(T, t_chunk)
    t_total = n_chunks * t_chunk

    xs_f = xs.astype(jnp.float32)
    if t_total != T:
        # Trailing pad steps compute junk that is sliced off below.
        xs_f = jnp.pad(xs_f, ((0, t_total - T), (0, 0), (0, 0)))
    xs_flat = xs_f.reshape(t_total * B, I)

    slab = pl.pallas_call(
        functools.partial(seq_rnn_kernel, hidden_size=H, output_size=O,
                          t_chunk=t_chunk, batch=B),
        out_shape=jax.ShapeDtypeStruct((t_total, B, n_pad), jnp.float32),
        grid=(n_chunks,),
        in_specs=[
            pl.BlockSpec((t_chunk * B, I), lambda c: (c, 0)),   # x chunk
            pl.BlockSpec((I, n_pad), lambda c: (0, 0)),         # resident Wx
            pl.BlockSpec((H, n_pad), lambda c: (0, 0)),         # resident Wh
            pl.BlockSpec((1, n_pad), lambda c: (0, 0)),         # resident bias
            pl.BlockSpec((B, H), lambda c: (0, 0)),             # resident h0
        ],
        out_specs=pl.BlockSpec((t_chunk, B, n_pad), lambda c: (c, 0, 0)),
        scratch_shapes=[pltpu.VMEM((B, H), jnp.float32)],        # h across chunks
        compiler_params=pltpu.CompilerParams(
            dimension_semantics=("arbitrary",)),                 # serial carry in T
    )(xs_flat, wx_pad, wh_pad, b_pad, h0.astype(jnp.float32))

    outs = slab[:T, :, H:H + O]
    hiddens = slab[:T, :, :H]
    return outs, hiddens


def seq_rnn_forward(x, h, params):
    """Single module-equivalent step: (softmax_out [B, O], new_hidden [B, H]).

    T=1 path is a single fused pallas_call (grid=(1,), t_chunk=1): one launch,
    no intermediate HBM traffic.
    """
    outs, hiddens = seq_rnn_sequence(x[None], h, params)
    return outs[0], hiddens[0]


# ----------------------------------------------------------------------------
# Parameter init (mirrors nn.Linear with fan_in = I + H; stored transposed [in, out])
# ----------------------------------------------------------------------------
def init_params(key, input_size, hidden_size, output_size):
    k = jax.random.split(key, 4)
    fan_in = input_size + hidden_size
    bound = 1.0 / jnp.sqrt(jnp.float32(fan_in))
    w_i2h = jax.random.uniform(k[0], (fan_in, hidden_size), jnp.float32, -bound, bound)
    b_i2h = jax.random.uniform(k[1], (1, hidden_size), jnp.float32, -bound, bound)
    w_i2o = jax.random.uniform(k[2], (fan_in, output_size), jnp.float32, -bound, bound)
    b_i2o = jax.random.uniform(k[3], (1, output_size), jnp.float32, -bound, bound)
    return {
        "wx_i2h": w_i2h[:input_size], "wh_i2h": w_i2h[input_size:], "b_i2h": b_i2h,
        "wx_i2o": w_i2o[:input_size], "wh_i2o": w_i2o[input_size:], "b_i2o": b_i2o,
    }


# ----------------------------------------------------------------------------
# Pure-JAX reference
# ----------------------------------------------------------------------------
def _ref_step(x, h, params):
    hi = lax.Precision.HIGHEST
    new_h = (jnp.dot(x, params["wx_i2h"], precision=hi)
             + jnp.dot(h, params["wh_i2h"], precision=hi) + params["b_i2h"])
    logits = (jnp.dot(x, params["wx_i2o"], precision=hi)
              + jnp.dot(h, params["wh_i2o"], precision=hi) + params["b_i2o"])
    return jax.nn.softmax(logits, axis=1), new_h


def reference_sequence(xs, h0, params):
    def step(h, x):
        out, new_h = _ref_step(x, h, params)
        return new_h, (out, new_h)
    _, (outs, hiddens) = lax.scan(step, h0, xs)
    return outs, hiddens


if __name__ == "__main__":
    # Shapes consistent with module defaults: embed=32, hidden=64, binary output.
    batch, input_size, hidden_size, output_size, seq_len = 8, 32, 64, 2, 16

    key = jax.random.PRNGKey(0)
    kx, kp = jax.random.split(key)
    params = init_params(kp, input_size, hidden_size, output_size)

    xs = jax.random.normal(kx, (seq_len, batch, input_size), jnp.float32)
    h0 = jnp.zeros((batch, hidden_size), jnp.float32)   # init_hidden

    # 1) Single step (exact module forward semantics).
    out1, h1 = jax.jit(seq_rnn_forward)(xs[0], h0, params)
    out1 = jax.block_until_ready(out1)
    h1 = jax.block_until_ready(h1)
    ref_out1, ref_h1 = _ref_step(xs[0], h0, params)
    assert out1.shape == (batch, output_size) and h1.shape == (batch, hidden_size)
    assert jnp.allclose(out1, ref_out1, atol=2e-3, rtol=2e-3), "single-step softmax mismatch"
    assert jnp.allclose(h1, ref_h1, atol=2e-3, rtol=2e-3), "single-step hidden mismatch"

    # 2) Full fused sequence (recurrence inside one kernel, weights resident).
    outs, hiddens = jax.jit(seq_rnn_sequence)(xs, h0, params)
    outs = jax.block_until_ready(outs)
    hiddens = jax.block_until_ready(hiddens)
    ref_outs, ref_hiddens = reference_sequence(xs, h0, params)
    assert jnp.allclose(outs, ref_outs, atol=2e-3, rtol=2e-3), "sequence softmax mismatch"
    assert jnp.allclose(hiddens, ref_hiddens, atol=2e-3, rtol=2e-3), "sequence hidden mismatch"

    print("KERNEL_OK")
</pallas_src>

<mosaic_0001>
module attributes {stable_mosaic.version = 11 : i64} {
  func.func @seq_rnn_kernel(%arg0: i32, %arg1: memref<8x32xf32, #tpu.memory_space<vmem>>, %arg2: memref<32x128xf32, #tpu.memory_space<vmem>>, %arg3: memref<64x128xf32, #tpu.memory_space<vmem>>, %arg4: memref<1x128xf32, #tpu.memory_space<vmem>>, %arg5: memref<8x64xf32, #tpu.memory_space<vmem>>, %arg6: memref<1x8x128xf32, #tpu.memory_space<vmem>>, %arg7: memref<8x64xf32, #tpu.memory_space<vmem>>) attributes {dimension_semantics = [#tpu.dimension_semantics<arbitrary>], iteration_bounds = array<i64: 1>, scalar_prefetch = 0 : i64, scratch_operands = 1 : i64, tpu.core_type = #tpu.core_type<tc>, window_params = [{transform_indices = @transform_0, window_bounds = array<i64: 8, 32>}, {pipeline_mode = #tpu.pipeline_mode<synchronous>, transform_indices = @transform_1, window_bounds = array<i64: 32, 128>}, {pipeline_mode = #tpu.pipeline_mode<synchronous>, transform_indices = @transform_2, window_bounds = array<i64: 64, 128>}, {pipeline_mode = #tpu.pipeline_mode<synchronous>, transform_indices = @transform_3, window_bounds = array<i64: 1, 128>}, {pipeline_mode = #tpu.pipeline_mode<synchronous>, transform_indices = @transform_4, window_bounds = array<i64: 8, 64>}, {transform_indices = @transform_5, window_bounds = array<i64: 1, 8, 128>}]} {
    %c0_i32 = arith.constant 0 : i32
    %0 = arith.cmpi eq, %arg0, %c0_i32 : i32
    %1 = arith.extui %0 : i1 to i32
    %c0_i32_0 = arith.constant 0 : i32
    %2 = arith.cmpi ne, %1, %c0_i32_0 : i32
    scf.if %2 {
      %c0_20 = arith.constant 0 : index
      %c0_21 = arith.constant 0 : index
      %38 = vector.load %arg5[%c0_20, %c0_21] : memref<8x64xf32, #tpu.memory_space<vmem>>, vector<8x64xf32>
      %c0_22 = arith.constant 0 : index
      %c0_23 = arith.constant 0 : index
      %39 = vector.load %arg7[%c0_22, %c0_23] : memref<8x64xf32, #tpu.memory_space<vmem>>, vector<8x64xf32>
      tpu.vector_store %arg7[%c0_22, %c0_23], %38 {strides = array<i32>} : memref<8x64xf32, #tpu.memory_space<vmem>>, vector<8x64xf32>,
    } else {
    }
    %3 = tpu.iota {dimensions = array<i32: 1>} : vector<8x128xi32>
    %c64_i32 = arith.constant 64 : i32
    %4 = vector.broadcast %c64_i32 : i32 to vector<8x128xi32>
    %5 = arith.cmpi slt, %3, %4 : vector<8x128xi32>
    %c64_i32_1 = arith.constant 64 : i32
    %6 = vector.broadcast %c64_i32_1 : i32 to vector<8x128xi32>
    %7 = arith.cmpi sge, %3, %6 : vector<8x128xi32>
    %c66_i32 = arith.constant 66 : i32
    %8 = vector.broadcast %c66_i32 : i32 to vector<8x128xi32>
    %9 = arith.cmpi slt, %3, %8 : vector<8x128xi32>
    %10 = arith.andi %7, %9 : vector<8x128xi1>
    %c0 = arith.constant 0 : index
    %c0_2 = arith.constant 0 : index
    %11 = vector.load %arg1[%c0, %c0_2] : memref<8x32xf32, #tpu.memory_space<vmem>>, vector<8x32xf32>
    %c0_3 = arith.constant 0 : index
    %c0_4 = arith.constant 0 : index
    %12 = vector.load %arg2[%c0_3, %c0_4] : memref<32x128xf32, #tpu.memory_space<vmem>>, vector<32x128xf32>
    %cst = arith.constant dense<0.000000e+00> : vector<8x128xf32>
    %13 = tpu.matmul %11, %12, %cst {dimension_numbers = #tpu.dot_dimension_numbers<[1], [0], [0], [1], [0, 0, 1, 1], [], []>} : vector<8x32xf32>, vector<32x128xf32>, vector<8x128xf32> -> vector<8x128xf32>
    %c0_5 = arith.constant 0 : index
    %c0_6 = arith.constant 0 : index
    %14 = vector.load %arg4[%c0_5, %c0_6] : memref<1x128xf32, #tpu.memory_space<vmem>>, vector<1x128xf32>
    %15 = vector.broadcast %14 : vector<1x128xf32> to vector<8x128xf32>
    %16 = arith.addf %13, %15 : vector<8x128xf32>
    %c0_7 = arith.constant 0 : index
    %c0_8 = arith.constant 0 : index
    %17 = vector.load %arg7[%c0_7, %c0_8] : memref<8x64xf32, #tpu.memory_space<vmem>>, vector<8x64xf32>
    %c0_9 = arith.constant 0 : index
    %c0_10 = arith.constant 0 : index
    %18 = vector.load %arg3[%c0_9, %c0_10] : memref<64x128xf32, #tpu.memory_space<vmem>>, vector<64x128xf32>
    %cst_11 = arith.constant dense<0.000000e+00> : vector<8x128xf32>
    %19 = tpu.matmul %17, %18, %cst_11 {dimension_numbers = #tpu.dot_dimension_numbers<[1], [0], [0], [1], [0, 0, 1, 1], [], []>} : vector<8x64xf32>, vector<64x128xf32>, vector<8x128xf32> -> vector<8x128xf32>
    %20 = arith.addf %16, %19 : vector<8x128xf32>
    %21 = vector.extract_strided_slice %20 {offsets = [0, 0], sizes = [8, 64], strides = [1, 1]} : vector<8x128xf32> to vector<8x64xf32>
    %cst_12 = arith.constant -1.000000e+30 : f32
    %22 = vector.broadcast %cst_12 : f32 to vector<8x128xf32>
    %23 = arith.select %10, %20, %22 : vector<8x128xi1>, vector<8x128xf32>
    %cst_13 = arith.constant dense<0xFF800000> : vector<8xf32>
    %24 = vector.multi_reduction <maximumf>, %23, %cst_13 [1] : vector<8x128xf32> to vector<8xf32>
    %25 = vector.shape_cast %24 : vector<8xf32> to vector<8x1xf32>
    %26 = vector.broadcast %25 : vector<8x1xf32> to vector<8x128xf32>
    %27 = arith.subf %23, %26 : vector<8x128xf32>
    %28 = math.exp %27 : vector<8x128xf32>
    %cst_14 = arith.constant dense<0.000000e+00> : vector<8xf32>
    %29 = vector.multi_reduction <add>, %28, %cst_14 [1] : vector<8x128xf32> to vector<8xf32>
    %30 = vector.shape_cast %29 : vector<8xf32> to vector<8x1xf32>
    %31 = vector.broadcast %30 : vector<8x1xf32> to vector<8x128xf32>
    %32 = arith.divf %28, %31 : vector<8x128xf32>
    %33 = arith.select %5, %20, %32 : vector<8x128xi1>, vector<8x128xf32>
    %c0_15 = arith.constant 0 : index
    %c0_16 = arith.constant 0 : index
    %c0_17 = arith.constant 0 : index
    %34 = vector.load %arg6[%c0_15, %c0_16, %c0_17] : memref<1x8x128xf32, #tpu.memory_space<vmem>>, vector<1x8x128xf32>
    %35 = vector.shape_cast %34 : vector<1x8x128xf32> to vector<8x128xf32>
    %36 = vector.shape_cast %33 : vector<8x128xf32> to vector<1x8x128xf32>
    tpu.vector_store %arg6[%c0_15, %c0_16, %c0_17], %36 {strides = array<i32>} : memref<1x8x128xf32, #tpu.memory_space<vmem>>, vector<1x8x128xf32>,
    %c0_18 = arith.constant 0 : index
    %c0_19 = arith.constant 0 : index
    %37 = vector.load %arg7[%c0_18, %c0_19] : memref<8x64xf32, #tpu.memory_space<vmem>>, vector<8x64xf32>
    tpu.vector_store %arg7[%c0_18, %c0_19], %21 {strides = array<i32>} : memref<8x64xf32, #tpu.memory_space<vmem>>, vector<8x64xf32>,
    return
  }
  func.func @transform_0(%arg0: i32) -> (i32, i32) {
    %c0_i32 = arith.constant 0 : i32
    %c0_i32_0 = arith.constant 0 : i32
    return %arg0, %c0_i32 : i32, i32
  }
  func.func @transform_1(%arg0: i32) -> (i32, i32) {
    %c0_i32 = arith.constant 0 : i32
    %c0_i32_0 = arith.constant 0 : i32
    %c0_i32_1 = arith.constant 0 : i32
    return %c0_i32, %c0_i32_0 : i32, i32
  }
  func.func @transform_2(%arg0: i32) -> (i32, i32) {
    %c0_i32 = arith.constant 0 : i32
    %c0_i32_0 = arith.constant 0 : i32
    %c0_i32_1 = arith.constant 0 : i32
    return %c0_i32, %c0_i32_0 : i32, i32
  }
  func.func @transform_3(%arg0: i32) -> (i32, i32) {
    %c0_i32 = arith.constant 0 : i32
    %c0_i32_0 = arith.constant 0 : i32
    %c0_i32_1 = arith.constant 0 : i32
    return %c0_i32, %c0_i32_0 : i32, i32
  }
  func.func @transform_4(%arg0: i32) -> (i32, i32) {
    %c0_i32 = arith.constant 0 : i32
    %c0_i32_0 = arith.constant 0 : i32
    %c0_i32_1 = arith.constant 0 : i32
    return %c0_i32, %c0_i32_0 : i32, i32
  }
  func.func @transform_5(%arg0: i32) -> (i32, i32, i32) {
    %c0_i32 = arith.constant 0 : i32
    %c0_i32_0 = arith.constant 0 : i32
    %c0_i32_1 = arith.constant 0 : i32
    return %arg0, %c0_i32, %c0_i32_0 : i32, i32, i32
  }
}

</mosaic_0001>

<llo_original>
// kernel: seq_rnn_forward.1
$region0: #{seq_rnn_forward.1}
  #allocation0 [shape = 'u32[]', space=smem, size = 0x4, offset = 0x4, fixed_abs, tag = 'smem constant byte address 0x4 - core index']
  #allocation1 [shape = 'u32[144,128]{1,0:T(1,128)}', space=vmem, size = 0x12000, scoped, tag = 'internal scratch']
  #allocation2 [shape = 'f32[8,64]{1,0:T(8,128)}', space=vmem, size = 0x1000, scoped, tag = 'scratch operand']
  %s0 = inlined_call_operand.vmem [shape: f32[8,32], index: 0, kind: input, shape index: {}]
  %s1 = inlined_call_operand.vmem [shape: f32[32,128], index: 1, kind: input, shape index: {}]
  %s2 = inlined_call_operand.vmem [shape: f32[64,128], index: 2, kind: input, shape index: {}]
  %s3 = inlined_call_operand.vmem [shape: f32[1,128], index: 3, kind: input, shape index: {}]
  %s4 = inlined_call_operand.vmem [shape: f32[8,64], index: 4, kind: input, shape index: {}]
  %s5 = inlined_call_operand.vmem [shape: f32[1,8,128], index: 5, kind: output, shape index: {}]
  %s6 = sld [smem:[#allocation0]]
  $region34: #{seq_rnn_forward.1} parent=0
    _
  %s8 = ssub.s32 1, %s6
  %s9 = scalar_select 0, %s8, %s6
  // Predicated region
  $region2: #{seq_rnn_forward.1} parent=0 // pred_check
    _
  $region3: #{seq_rnn_forward.1} parent=0 // pred_check_branch
    %11 = sbr.rel (0) target = $region5
  $region4: #{seq_rnn_forward.1} parent=0 // pred_region
    _
  $region5: #{seq_rnn_forward.1} parent=0 // pred_fallthru
    _
  // Predicated region
  $region6: #{seq_rnn_forward.1} parent=0 // pred_check
    _
  $region7: #{seq_rnn_forward.1} parent=0 // pred_check_branch
    %13 = sbr.rel (0) target = $region9
  $region8: #{seq_rnn_forward.1} parent=0 // pred_region
    _
  $region9: #{seq_rnn_forward.1} parent=0 // pred_fallthru
    _
  // Predicated region
  $region10: #{seq_rnn_forward.1} parent=0 // pred_check
    _
  $region11: #{seq_rnn_forward.1} parent=0 // pred_check_branch
    %15 = sbr.rel (0) target = $region13
  $region12: #{seq_rnn_forward.1} parent=0 // pred_region
    _
  $region13: #{seq_rnn_forward.1} parent=0 // pred_fallthru
    _
  // Predicated region
  $region14: #{seq_rnn_forward.1} parent=0 // pred_check
    _
  $region15: #{seq_rnn_forward.1} parent=0 // pred_check_branch
    %17 = sbr.rel (0) target = $region17
  $region16: #{seq_rnn_forward.1} parent=0 // pred_region
    _
  $region17: #{seq_rnn_forward.1} parent=0 // pred_fallthru
    _
  // Predicated region
  $region18: #{seq_rnn_forward.1} parent=0 // pred_check
    _
  $region19: #{seq_rnn_forward.1} parent=0 // pred_check_branch
    %19 = sbr.rel (0) target = $region21
  $region20: #{seq_rnn_forward.1} parent=0 // pred_region
    _
  $region21: #{seq_rnn_forward.1} parent=0 // pred_fallthru
    _
  %p20 = scmp.eq.s32.totalorder 0, 0
  // Predicated region
  $region22: #{seq_rnn_forward.1} parent=0 // pred_check
    %p21 = pneg %p20
  $region23: #{seq_rnn_forward.1} parent=0 // pred_check_branch
    %23 = sbr.rel (%p21) target = $region25
  $region24: #{seq_rnn_forward.1} parent=0 // pred_region
    %v24 = vld [vmem:[%s4] sm:$0xff]
    %vm25 = vcmask 523264
    %26 = vst.msk [vmem:[#allocation2] sm:$0xff] %vm25, %v24
  $region25: #{seq_rnn_forward.1} parent=0 // pred_fallthru
    _
  %v27 = vlaneseq
  %v28 = vand.u32 %v27, 127
  %vm29 = vcmp.lt.s32.totalorder %v28, 64
  %vm30 = vcmp.ge.s32.totalorder %v28, 64
  %vm31 = vcmp.lt.s32.totalorder %v28, 66
  %vm32 = vmand %vm30, %vm31
  %v33 = vld [vmem:[%s0] sm:$0xff]
  %v34 = vld [vmem:[%s1] sm:$0xff]
  %v35 = vld [vmem:[%s1 + $0x8] sm:$0xff]
  %v36 = vld [vmem:[%s1 + $0x10] sm:$0xff]
  %v37 = vld [vmem:[%s1 + $0x18] sm:$0xff]
  %v38 = vld [vmem:[%s3] sm:$0x1]
  %v40 = vlaneseq
  %v41 = vshrl.u32 %v40, 7
  %v42 = vsub.s32 0, %v41
  %v43 = vrot.slane %v38, %v42
  %vm45 = vcmask 261120
  %v47 = vsel %vm45, %v33, 0
  %49 = vmatprep.subr.mxu0 0.0
  %50 = vmatpush1.msra.mxu0 %v34
  %51 = vmatprep.subr.mxu0 0.0
  %52 = vmatpush1.msra.mxu0 %v35
  %53 = vmatprep.subr.mxu0 0.0
  %54 = vmatpush1.msra.mxu0 %v36
  %55 = vmatprep.subr.mxu0 0.0
  %56 = vmatpush1.msra.mxu0 %v37
  %57 = vmatprep.subr.mxu0 0.0
  %58 = vmatpush1.msra.mxu0 0.0
  %59 = vmatprep.subr.mxu0 0.0
  %60 = vmatpush1.msra.mxu0 0.0
  %61 = vmatprep.subr.mxu0 0.0
  %62 = vmatpush1.msra.mxu0 0.0
  %63 = vmatprep.subr.mxu0 0.0
  %64 = vmatpush1.msra.mxu0 0.0
  %65 = vmatprep.subr.mxu0 0.0
  %66 = vmatpush1.msra.mxu0 0.0
  %67 = vmatprep.subr.mxu0 0.0
  %68 = vmatpush1.msra.mxu0 0.0
  %69 = vmatprep.subr.mxu0 0.0
  %70 = vmatpush1.msra.mxu0 0.0
  %71 = vmatprep.subr.mxu0 0.0
  %72 = vmatpush1.msra.mxu0 0.0
  %73 = vmatprep.subr.mxu0 0.0
  %74 = vmatpush1.msra.mxu0 0.0
  %75 = vmatprep.subr.mxu0 0.0
  %76 = vmatpush1.msra.mxu0 0.0
  %77 = vmatprep.subr.mxu0 0.0
  %78 = vmatpush1.msra.mxu0 0.0
  %79 = vmatprep.subr.mxu0 0.0
  %80 = vmatpush1.msra.mxu0 0.0
  %81 = vmatprep.subr.mxu0 0.0
  %82 = vmatpush1.msra.mxu0 0.0
  %83 = vmatprep.subr.mxu0 0.0
  %84 = vmatpush1.msra.mxu0 0.0
  %85 = vmatprep.subr.mxu0 0.0
  %86 = vmatpush1.msra.mxu0 0.0
  %87 = vmatprep.subr.mxu0 0.0
  %88 = vmatpush1.msra.mxu0 0.0
  %89 = vmatprep.subr.mxu0 0.0
  %90 = vmatpush1.msra.mxu0 0.0
  %91 = vmatprep.subr.mxu0 0.0
  %92 = vmatpush1.msra.mxu0 0.0
  %93 = vmatprep.subr.mxu0 0.0
  %94 = vmatpush1.msra.mxu0 0.0
  %95 = vmatprep.subr.mxu0 0.0
  %96 = vmatpush1.msra.mxu0 0.0
  %97 = vmatprep.subr.mxu0 0.0
  %98 = vmatpush1.msra.mxu0 0.0
  %99 = vmatprep.subr.mxu0 0.0
  %100 = vmatpush1.msra.mxu0 0.0
  %101 = vmatprep.subr.mxu0 0.0
  %102 = vmatpush1.msra.mxu0 0.0
  %103 = vmatprep.subr.mxu0 0.0
  %104 = vmatpush1.msra.mxu0 0.0
  %105 = vmatprep.subr.mxu0 0.0
  %106 = vmatpush1.msra.mxu0 0.0
  %107 = vmatprep.subr.mxu0 0.0
  %108 = vmatpush1.msra.mxu0 0.0
  %109 = vmatprep.subr.mxu0 0.0
  %110 = vmatpush1.msra.mxu0 0.0
  %111 = vmatprep.subr.mxu0 0.0
  %112 = vmatpush1.msra.mxu0 0.0
  %113 = vmatprep.mubr.f32.mxu0 0.0
  %114 = vmatmul.mubr.f32.gmra.mrb[0].mxu0 %v47
  %v115 = vpop.f32.mrb[0].mxu0
  %v116 = vadd.f32 %v43, %v115
  %v117 = vpop.f32.mrb[0].mxu0
  %118 = vdwg.mxu0
  %v119 = vld [vmem:[#allocation2] sm:$0xff]
  %v120 = vld [vmem:[%s2] sm:$0xff]
  %v121 = vld [vmem:[%s2 + $0x8] sm:$0xff]
  %v122 = vld [vmem:[%s2 + $0x10] sm:$0xff]
  %v123 = vld [vmem:[%s2 + $0x18] sm:$0xff]
  %v124 = vld [vmem:[%s2 + $0x20] sm:$0xff]
  %v125 = vld [vmem:[%s2 + $0x28] sm:$0xff]
  %v126 = vld [vmem:[%s2 + $0x30] sm:$0xff]
  %v127 = vld [vmem:[%s2 + $0x38] sm:$0xff]
  %vm128 = vcmask 523264
  %v130 = vsel %vm128, %v119, 0
  %132 = vmatprep.subr.mxu0 0.0
  %133 = vmatpush1.msra.mxu0 %v120
  %134 = vmatprep.subr.mxu0 0.0
  %135 = vmatpush1.msra.mxu0 %v121
  %136 = vmatprep.subr.mxu0 0.0
  %137 = vmatpush1.msra.mxu0 %v122
  %138 = vmatprep.subr.mxu0 0.0
  %139 = vmatpush1.msra.mxu0 %v123
  %140 = vmatprep.subr.mxu0 0.0
  %141 = vmatpush1.msra.mxu0 %v124
  %142 = vmatprep.subr.mxu0 0.0
  %143 = vmatpush1.msra.mxu0 %v125
  %144 = vmatprep.subr.mxu0 0.0
  %145 = vmatpush1.msra.mxu0 %v126
  %146 = vmatprep.subr.mxu0 0.0
  %147 = vmatpush1.msra.mxu0 %v127
  %148 = vmatprep.subr.mxu0 0.0
  %149 = vmatpush1.msra.mxu0 0.0
  %150 = vmatprep.subr.mxu0 0.0
  %151 = vmatpush1.msra.mxu0 0.0
  %152 = vmatprep.subr.mxu0 0.0
  %153 = vmatpush1.msra.mxu0 0.0
  %154 = vmatprep.subr.mxu0 0.0
  %155 = vmatpush1.msra.mxu0 0.0
  %156 = vmatprep.subr.mxu0 0.0
  %157 = vmatpush1.msra.mxu0 0.0
  %158 = vmatprep.subr.mxu0 0.0
  %159 = vmatpush1.msra.mxu0 0.0
  %160 = vmatprep.subr.mxu0 0.0
  %161 = vmatpush1.msra.mxu0 0.0
  %162 = vmatprep.subr.mxu0 0.0
  %163 = vmatpush1.msra.mxu0 0.0
  %164 = vmatprep.subr.mxu0 0.0
  %165 = vmatpush1.msra.mxu0 0.0
  %166 = vmatprep.subr.mxu0 0.0
  %167 = vmatpush1.msra.mxu0 0.0
  %168 = vmatprep.subr.mxu0 0.0
  %169 = vmatpush1.msra.mxu0 0.0
  %170 = vmatprep.subr.mxu0 0.0
  %171 = vmatpush1.msra.mxu0 0.0
  %172 = vmatprep.subr.mxu0 0.0
  %173 = vmatpush1.msra.mxu0 0.0
  %174 = vmatprep.subr.mxu0 0.0
  %175 = vmatpush1.msra.mxu0 0.0
  %176 = vmatprep.subr.mxu0 0.0
  %177 = vmatpush1.msra.mxu0 0.0
  %178 = vmatprep.subr.mxu0 0.0
  %179 = vmatpush1.msra.mxu0 0.0
  %180 = vmatprep.subr.mxu0 0.0
  %181 = vmatpush1.msra.mxu0 0.0
  %182 = vmatprep.subr.mxu0 0.0
  %183 = vmatpush1.msra.mxu0 0.0
  %184 = vmatprep.subr.mxu0 0.0
  %185 = vmatpush1.msra.mxu0 0.0
  %186 = vmatprep.subr.mxu0 0.0
  %187 = vmatpush1.msra.mxu0 0.0
  %188 = vmatprep.subr.mxu0 0.0
  %189 = vmatpush1.msra.mxu0 0.0
  %190 = vmatprep.subr.mxu0 0.0
  %191 = vmatpush1.msra.mxu0 0.0
  %192 = vmatprep.subr.mxu0 0.0
  %193 = vmatpush1.msra.mxu0 0.0
  %194 = vmatprep.subr.mxu0 0.0
  %195 = vmatpush1.msra.mxu0 0.0
  %196 = vmatprep.mubr.f32.mxu0 0.0
  %197 = vmatmul.mubr.f32.gmra.mrb[0].mxu0 %v130
  %v198 = vpop.f32.mrb[0].mxu0
  %v199 = vadd.f32 0.0, %v198
  %v200 = vpop.f32.mrb[0].mxu0
  %201 = vdwg.mxu0
  %v202 = vadd.f32 %v116, %v199
  %v203 = vsel %vm32, %v202, -1e+30
  %204 = vmax.xlane.f32.xlu0 %v203
  %v205 = vpop.xlane.xlu0 %204
  %v206 = vsub.f32 %v203, %v205
  %v207 = vmul.f32 %v206, 1.442695
  %v208 = vpow.pop %v207
  %209 = vadd.xlane.f32.xlu0 %v208
  %v210 = vpop.xlane.xlu0 %209
  %v211 = vrcp.pop %v210
  %v212 = vmul.f32 %v208, %v211
  %v213 = vsel %vm29, %v202, %v212
  %214 = vst [vmem:[%s5] sm:$0xff] %v213
  %215 = vst.msk [vmem:[#allocation2] sm:$0xff] %vm128, %v202
  // Predicated region
  $region26: #{seq_rnn_forward.1} parent=0 // pred_check
    _
  $region27: #{seq_rnn_forward.1} parent=0 // pred_check_branch
    %217 = sbr.rel (0) target = $region29
  $region28: #{seq_rnn_forward.1} parent=0 // pred_region
    _
  $region29: #{seq_rnn_forward.1} parent=0 // pred_fallthru
    _
  // Predicated region
  $region30: #{seq_rnn_forward.1} parent=0 // pred_check
    _
  $region31: #{seq_rnn_forward.1} parent=0 // pred_check_branch
    %219 = sbr.rel (0) target = $region33
  $region32: #{seq_rnn_forward.1} parent=0 // pred_region
    _
  $region33: #{seq_rnn_forward.1} parent=0 // pred_fallthru
    _

</llo_original>
